<compile_context>
chip_gen: v5e
topology: v5e:2x2
jax: 0.10.0
libtpu: 0.0.40
codegen_flags: <defaults>
</compile_context>

<pallas_src>
import jax
import jax.numpy as jnp
from jax.experimental import pallas as pl
from jax.experimental.pallas import tpu as pltpu

IN_FEATS = 4
IN_PAD = 8          # pad input feature dim to a full sublane group
HIDDEN = 64
HIDDEN_PAD = 128    # pad hidden width to a full lane group
OUT_FEATS = 2
OUT_PAD = 128       # lane-dense output slab; sliced to 2 in the wrapper


def _round_up(n, m):
    return ((n + m - 1) // m) * m


def _mlp_kernel(x_ref, w1_ref, b1_ref, w2_ref, b2_ref, w3_ref, b3_ref, o_ref):
    x = x_ref[...]  # (TM, IN_PAD) f32

    # fc1 + tanh   (K=8 padded; zero-padded x columns x zero-padded w1 rows)
    h1 = jnp.tanh(
        jnp.dot(x, w1_ref[...], preferred_element_type=jnp.float32) + b1_ref[...]
    )

    # fc2 + tanh   (clean 128x128 MXU tile)
    h2 = jnp.tanh(
        jnp.dot(h1, w2_ref[...], preferred_element_type=jnp.float32) + b2_ref[...]
    )

    # fc3 (padded to 128 output lanes) + softmax over the 2 valid lanes.
    logits = jnp.dot(h2, w3_ref[...], preferred_element_type=jnp.float32) + b3_ref[...]
    lane = jax.lax.broadcasted_iota(jnp.int32, logits.shape, 1)
    logits = jnp.where(lane < OUT_FEATS, logits, jnp.float32(-1e30))

    m = jnp.max(logits, axis=1, keepdims=True)
    e = jnp.exp(logits - m)
    denom = jnp.sum(e, axis=1, keepdims=True)
    # exact reciprocal: keeps the 1e-5 tolerance (approx=True would use EUP vrcp
    # but its ~1e-3 worst-case relative error risks the assert).
    probs = e * pl.reciprocal(denom, approx=False)

    # Lane-dense (TM, 128) store; padded lanes hold exact zeros.
    o_ref[...] = probs.astype(o_ref.dtype)


def net_forward(x, padded_params, *, block_b=512):
    """x: (B, 4) float32.  padded_params: dict from pad_params()."""
    w1, b1 = padded_params["w1"], padded_params["b1"]
    w2, b2 = padded_params["w2"], padded_params["b2"]
    w3, b3 = padded_params["w3"], padded_params["b3"]

    B = x.shape[0]
    # Batch tile: multiple of 8, at most block_b (well under v7x's 32 MiB
    # scoped-VMEM default even double-buffered: 512*128*4B*2 = 0.5 MiB).
    tm = min(block_b, _round_up(max(B, 1), 8))
    b_pad = _round_up(B, tm)
    grid = (b_pad // tm,)

    # Zero-pad batch to a tile multiple and features 4 -> 8.
    x_pad = jnp.zeros((b_pad, IN_PAD), jnp.float32)
    x_pad = x_pad.at[:B, :IN_FEATS].set(x.astype(jnp.float32))

    resident = lambda shape: pl.BlockSpec(shape, lambda i: (0, 0))

    out = pl.pallas_call(
        _mlp_kernel,
        out_shape=jax.ShapeDtypeStruct((b_pad, OUT_PAD), jnp.float32),
        grid=grid,
        in_specs=[
            pl.BlockSpec((tm, IN_PAD), lambda i: (i, 0)),   # x tile per step
            resident(w1.shape), resident(b1.shape),          # weights stay in VMEM
            resident(w2.shape), resident(b2.shape),
            resident(w3.shape), resident(b3.shape),
        ],
        out_specs=pl.BlockSpec((tm, OUT_PAD), lambda i: (i, 0)),
        compiler_params=pltpu.CompilerParams(
            dimension_semantics=("parallel",),
        ),
    )(x_pad, w1, b1, w2, b2, w3, b3)

    return out[:B, :OUT_FEATS]


def init_params(key):
    """nn.Linear-style init U(-1/sqrt(fan_in), 1/sqrt(fan_in)), weights stored
    transposed as (in_features, out_features); biases as (1, out_features)."""
    def linear(key, fan_in, fan_out):
        kw, kb = jax.random.split(key)
        bound = 1.0 / jnp.sqrt(jnp.float32(fan_in))
        w = jax.random.uniform(kw, (fan_in, fan_out), jnp.float32, -bound, bound)
        b = jax.random.uniform(kb, (1, fan_out), jnp.float32, -bound, bound)
        return w, b

    k1, k2, k3 = jax.random.split(key, 3)
    w1, b1 = linear(k1, IN_FEATS, HIDDEN)
    w2, b2 = linear(k2, HIDDEN, HIDDEN)
    w3, b3 = linear(k3, HIDDEN, OUT_FEATS)
    return {"w1": w1, "b1": b1, "w2": w2, "b2": b2, "w3": w3, "b3": b3}


def pad_params(p):
    """Zero-pad parameters to the lane-dense kernel layout (one-time cost)."""
    def pad2(a, rows, cols):
        out = jnp.zeros((rows, cols), a.dtype)
        return out.at[: a.shape[0], : a.shape[1]].set(a)

    return {
        "w1": pad2(p["w1"], IN_PAD, HIDDEN_PAD),
        "b1": pad2(p["b1"], 1, HIDDEN_PAD),
        "w2": pad2(p["w2"], HIDDEN_PAD, HIDDEN_PAD),
        "b2": pad2(p["b2"], 1, HIDDEN_PAD),
        "w3": pad2(p["w3"], HIDDEN_PAD, OUT_PAD),
        "b3": pad2(p["b3"], 1, OUT_PAD),
    }


def _reference(x, p):
    h1 = jnp.tanh(x @ p["w1"] + p["b1"])
    h2 = jnp.tanh(h1 @ p["w2"] + p["b2"])
    logits = h2 @ p["w3"] + p["b3"]
    return jax.nn.softmax(logits, axis=1)


if __name__ == "__main__":
    key = jax.random.PRNGKey(0)
    k_params, k_x = jax.random.split(key)

    params = init_params(k_params)
    kernel_params = pad_params(params)

    # CartPole-style observation: batch of 2 states with 4 features each.
    x = jax.random.normal(k_x, (2, 4), jnp.float32)

    out = net_forward(x, kernel_params)
    out = jax.block_until_ready(out)

    ref = _reference(x, params)
    assert out.shape == (2, 2)
    assert jnp.allclose(jnp.sum(out, axis=1), 1.0, atol=1e-5)
    assert jnp.allclose(out, ref, atol=1e-5, rtol=1e-5)

    # Also exercise a large, non-tile-multiple batch to validate the grid path.
    xb = jax.random.normal(jax.random.PRNGKey(1), (1000, 4), jnp.float32)
    out_b = jax.block_until_ready(net_forward(xb, kernel_params))
    ref_b = _reference(xb, params)
    assert out_b.shape == (1000, 2)
    assert jnp.allclose(out_b, ref_b, atol=1e-5, rtol=1e-5)

    print("KERNEL_OK")
</pallas_src>

<mosaic_0001>
module attributes {stable_mosaic.version = 11 : i64} {
  func.func @_mlp_kernel(%arg0: i32, %arg1: memref<8x8xf32, #tpu.memory_space<vmem>>, %arg2: memref<8x128xf32, #tpu.memory_space<vmem>>, %arg3: memref<1x128xf32, #tpu.memory_space<vmem>>, %arg4: memref<128x128xf32, #tpu.memory_space<vmem>>, %arg5: memref<1x128xf32, #tpu.memory_space<vmem>>, %arg6: memref<128x128xf32, #tpu.memory_space<vmem>>, %arg7: memref<1x128xf32, #tpu.memory_space<vmem>>, %arg8: memref<8x128xf32, #tpu.memory_space<vmem>>) attributes {dimension_semantics = [#tpu.dimension_semantics<parallel>], iteration_bounds = array<i64: 1>, scalar_prefetch = 0 : i64, scratch_operands = 0 : i64, tpu.core_type = #tpu.core_type<tc>, window_params = [{transform_indices = @transform_0, window_bounds = array<i64: 8, 8>}, {pipeline_mode = #tpu.pipeline_mode<synchronous>, transform_indices = @transform_1, window_bounds = array<i64: 8, 128>}, {pipeline_mode = #tpu.pipeline_mode<synchronous>, transform_indices = @transform_2, window_bounds = array<i64: 1, 128>}, {pipeline_mode = #tpu.pipeline_mode<synchronous>, transform_indices = @transform_3, window_bounds = array<i64: 128, 128>}, {pipeline_mode = #tpu.pipeline_mode<synchronous>, transform_indices = @transform_4, window_bounds = array<i64: 1, 128>}, {pipeline_mode = #tpu.pipeline_mode<synchronous>, transform_indices = @transform_5, window_bounds = array<i64: 128, 128>}, {pipeline_mode = #tpu.pipeline_mode<synchronous>, transform_indices = @transform_6, window_bounds = array<i64: 1, 128>}, {transform_indices = @transform_7, window_bounds = array<i64: 8, 128>}]} {
    %c0 = arith.constant 0 : index
    %c0_0 = arith.constant 0 : index
    %0 = vector.load %arg1[%c0, %c0_0] : memref<8x8xf32, #tpu.memory_space<vmem>>, vector<8x8xf32>
    %c0_1 = arith.constant 0 : index
    %c0_2 = arith.constant 0 : index
    %1 = vector.load %arg2[%c0_1, %c0_2] : memref<8x128xf32, #tpu.memory_space<vmem>>, vector<8x128xf32>
    %cst = arith.constant dense<0.000000e+00> : vector<8x128xf32>
    %2 = tpu.matmul %0, %1, %cst {dimension_numbers = #tpu.dot_dimension_numbers<[1], [0], [0], [1], [0, 0, 1, 1], [], []>} : vector<8x8xf32>, vector<8x128xf32>, vector<8x128xf32> -> vector<8x128xf32>
    %c0_3 = arith.constant 0 : index
    %c0_4 = arith.constant 0 : index
    %3 = vector.load %arg3[%c0_3, %c0_4] : memref<1x128xf32, #tpu.memory_space<vmem>>, vector<1x128xf32>
    %4 = vector.broadcast %3 : vector<1x128xf32> to vector<8x128xf32>
    %5 = arith.addf %2, %4 : vector<8x128xf32>
    %6 = math.tanh %5 : vector<8x128xf32>
    %c0_5 = arith.constant 0 : index
    %c0_6 = arith.constant 0 : index
    %7 = vector.load %arg4[%c0_5, %c0_6] : memref<128x128xf32, #tpu.memory_space<vmem>>, vector<128x128xf32>
    %cst_7 = arith.constant dense<0.000000e+00> : vector<8x128xf32>
    %8 = tpu.matmul %6, %7, %cst_7 {dimension_numbers = #tpu.dot_dimension_numbers<[1], [0], [0], [1], [0, 0, 1, 1], [], []>} : vector<8x128xf32>, vector<128x128xf32>, vector<8x128xf32> -> vector<8x128xf32>
    %c0_8 = arith.constant 0 : index
    %c0_9 = arith.constant 0 : index
    %9 = vector.load %arg5[%c0_8, %c0_9] : memref<1x128xf32, #tpu.memory_space<vmem>>, vector<1x128xf32>
    %10 = vector.broadcast %9 : vector<1x128xf32> to vector<8x128xf32>
    %11 = arith.addf %8, %10 : vector<8x128xf32>
    %12 = math.tanh %11 : vector<8x128xf32>
    %c0_10 = arith.constant 0 : index
    %c0_11 = arith.constant 0 : index
    %13 = vector.load %arg6[%c0_10, %c0_11] : memref<128x128xf32, #tpu.memory_space<vmem>>, vector<128x128xf32>
    %cst_12 = arith.constant dense<0.000000e+00> : vector<8x128xf32>
    %14 = tpu.matmul %12, %13, %cst_12 {dimension_numbers = #tpu.dot_dimension_numbers<[1], [0], [0], [1], [0, 0, 1, 1], [], []>} : vector<8x128xf32>, vector<128x128xf32>, vector<8x128xf32> -> vector<8x128xf32>
    %c0_13 = arith.constant 0 : index
    %c0_14 = arith.constant 0 : index
    %15 = vector.load %arg7[%c0_13, %c0_14] : memref<1x128xf32, #tpu.memory_space<vmem>>, vector<1x128xf32>
    %16 = vector.broadcast %15 : vector<1x128xf32> to vector<8x128xf32>
    %17 = arith.addf %14, %16 : vector<8x128xf32>
    %18 = tpu.iota {dimensions = array<i32: 1>} : vector<8x128xi32>
    %c2_i32 = arith.constant 2 : i32
    %19 = vector.broadcast %c2_i32 : i32 to vector<8x128xi32>
    %20 = arith.cmpi slt, %18, %19 : vector<8x128xi32>
    %cst_15 = arith.constant -1.000000e+30 : f32
    %21 = vector.broadcast %cst_15 : f32 to vector<8x128xf32>
    %22 = arith.select %20, %17, %21 : vector<8x128xi1>, vector<8x128xf32>
    %cst_16 = arith.constant dense<0xFF800000> : vector<8xf32>
    %23 = vector.multi_reduction <maximumf>, %22, %cst_16 [1] : vector<8x128xf32> to vector<8xf32>
    %24 = vector.shape_cast %23 : vector<8xf32> to vector<8x1xf32>
    %25 = vector.broadcast %24 : vector<8x1xf32> to vector<8x128xf32>
    %26 = arith.subf %22, %25 : vector<8x128xf32>
    %27 = math.exp %26 : vector<8x128xf32>
    %cst_17 = arith.constant dense<0.000000e+00> : vector<8xf32>
    %28 = vector.multi_reduction <add>, %27, %cst_17 [1] : vector<8x128xf32> to vector<8xf32>
    %29 = vector.shape_cast %28 : vector<8xf32> to vector<8x1xf32>
    %30 = tpu.reciprocal %29 : vector<8x1xf32> -> vector<8x1xf32>
    %31 = vector.broadcast %30 : vector<8x1xf32> to vector<8x128xf32>
    %32 = arith.mulf %27, %31 : vector<8x128xf32>
    %c0_18 = arith.constant 0 : index
    %c0_19 = arith.constant 0 : index
    %33 = vector.load %arg8[%c0_18, %c0_19] : memref<8x128xf32, #tpu.memory_space<vmem>>, vector<8x128xf32>
    tpu.vector_store %arg8[%c0_18, %c0_19], %32 {strides = array<i32>} : memref<8x128xf32, #tpu.memory_space<vmem>>, vector<8x128xf32>,
    return
  }
  func.func @transform_0(%arg0: i32) -> (i32, i32) {
    %c0_i32 = arith.constant 0 : i32
    %c0_i32_0 = arith.constant 0 : i32
    return %arg0, %c0_i32 : i32, i32
  }
  func.func @transform_1(%arg0: i32) -> (i32, i32) {
    %c0_i32 = arith.constant 0 : i32
    %c0_i32_0 = arith.constant 0 : i32
    %c0_i32_1 = arith.constant 0 : i32
    return %c0_i32, %c0_i32_0 : i32, i32
  }
  func.func @transform_2(%arg0: i32) -> (i32, i32) {
    %c0_i32 = arith.constant 0 : i32
    %c0_i32_0 = arith.constant 0 : i32
    %c0_i32_1 = arith.constant 0 : i32
    return %c0_i32, %c0_i32_0 : i32, i32
  }
  func.func @transform_3(%arg0: i32) -> (i32, i32) {
    %c0_i32 = arith.constant 0 : i32
    %c0_i32_0 = arith.constant 0 : i32
    %c0_i32_1 = arith.constant 0 : i32
    return %c0_i32, %c0_i32_0 : i32, i32
  }
  func.func @transform_4(%arg0: i32) -> (i32, i32) {
    %c0_i32 = arith.constant 0 : i32
    %c0_i32_0 = arith.constant 0 : i32
    %c0_i32_1 = arith.constant 0 : i32
    return %c0_i32, %c0_i32_0 : i32, i32
  }
  func.func @transform_5(%arg0: i32) -> (i32, i32) {
    %c0_i32 = arith.constant 0 : i32
    %c0_i32_0 = arith.constant 0 : i32
    %c0_i32_1 = arith.constant 0 : i32
    return %c0_i32, %c0_i32_0 : i32, i32
  }
  func.func @transform_6(%arg0: i32) -> (i32, i32) {
    %c0_i32 = arith.constant 0 : i32
    %c0_i32_0 = arith.constant 0 : i32
    %c0_i32_1 = arith.constant 0 : i32
    return %c0_i32, %c0_i32_0 : i32, i32
  }
  func.func @transform_7(%arg0: i32) -> (i32, i32) {
    %c0_i32 = arith.constant 0 : i32
    %c0_i32_0 = arith.constant 0 : i32
    return %arg0, %c0_i32 : i32, i32
  }
}

</mosaic_0001>

<llo_original>
// kernel: tpu_custom_call.1
$region0: #{tpu_custom_call.1}
  #allocation0 [shape = 'u32[]', space=smem, size = 0x4, offset = 0x4, fixed_abs, tag = 'smem constant byte address 0x4 - core index']
  #allocation1 [shape = 'u32[72,128]{1,0:T(1,128)}', space=vmem, size = 0x9000, scoped, tag = 'internal scratch']
  %s0 = inlined_call_operand.hbm [shape: f32[8,8], index: 0, kind: input, shape index: {}]
  %s1 = inlined_call_operand.hbm [shape: f32[8,128], index: 1, kind: input, shape index: {}]
  %s2 = inlined_call_operand.vmem [shape: f32[1,128], index: 2, kind: input, shape index: {}]
  %s3 = inlined_call_operand.hbm [shape: f32[128,128], index: 3, kind: input, shape index: {}]
  %s4 = inlined_call_operand.vmem [shape: f32[1,128], index: 4, kind: input, shape index: {}]
  %s5 = inlined_call_operand.hbm [shape: f32[128,128], index: 5, kind: input, shape index: {}]
  %s6 = inlined_call_operand.vmem [shape: f32[1,128], index: 6, kind: input, shape index: {}]
  %s7 = inlined_call_operand.hbm [shape: f32[8,128], index: 7, kind: output, shape index: {}]
  %s8 = sld [smem:[#allocation0]]
  $region54: #{tpu_custom_call.1} parent=0
    _
  %s10 = ssub.s32 1, %s8
  %s11 = scalar_select 0, %s10, %s8
  $region1: #{tpu_custom_call.1} parent=0
    #allocation2 [shape = 'u8[4096]{0}', space=vmem, size = 0x1000, scoped, tag = 'input window, operand 0, single buffered']
    #allocation3 [shape = 's32[1]{0}', space=sflag, size = 0x4, scoped, tag = 'scoped memory for tpu_custom_call.1']
    #allocation4 [shape = 's32[1]{0}', space=sflag, size = 0x4, scoped, tag = 'scoped memory for tpu_custom_call.1']
    #allocation5 [shape = 'u8[4096]{0}', space=vmem, size = 0x1000, scoped, tag = 'input window, operand 1, single buffered']
    #allocation6 [shape = 's32[1]{0}', space=sflag, size = 0x4, scoped, tag = 'scoped memory for tpu_custom_call.1']
    #allocation7 [shape = 'u8[65536]{0}', space=vmem, size = 0x10000, scoped, tag = 'input window, operand 3, single buffered']
    #allocation8 [shape = 'u8[65536]{0}', space=vmem, size = 0x10000, scoped, tag = 'input window, operand 5, single buffered']
    #allocation9 [shape = 's32[1]{0}', space=sflag, size = 0x4, scoped, tag = 'scoped memory for tpu_custom_call.1']
    #allocation10 [shape = 'u8[4096]{0}', space=vmem, size = 0x1000, scoped, tag = 'output window, operand 0, single buffered']
    %12 = vsyncpa [#allocation3], 0
    %13 = vsyncpa [#allocation6], 0
    %14 = vsyncpa [#allocation9], 0
    %15 = vsyncpa [#allocation4], 0
    // Predicated region
    $region2: #{tpu_custom_call.1} parent=1 // pred_check
      _
    $region3: #{tpu_custom_call.1} parent=1 // pred_check_branch
      %17 = sbr.rel (0) target = $region5
    $region4: #{tpu_custom_call.1} parent=1 // pred_region
      %19 = vsyncadd [#allocation3], 0
      %s21 = sshll.u32 %s0, 4
      %s22 = int_to_ptr.hbm [resolvable:$true] %s21
      %s23 = sshll.u32 [#allocation2], 4
      %s24 = int_to_ptr.vmem [resolvable:$true] %s23
      %26 = dma.hbm_to_vmem [thread:$0]  %s22, 128, %s24, [#allocation3]
    $region5: #{tpu_custom_call.1} parent=1 // pred_fallthru
      _
    // Predicated region
    $region6: #{tpu_custom_call.1} parent=1 // pred_check
      _
    $region7: #{tpu_custom_call.1} parent=1 // pred_check_branch
      %28 = sbr.rel (0) target = $region9
    $region8: #{tpu_custom_call.1} parent=1 // pred_region
      %30 = vsyncadd [#allocation6], 0
      %s32 = sshll.u32 %s1, 4
      %s33 = int_to_ptr.hbm [resolvable:$true] %s32
      %s34 = sshll.u32 [#allocation5], 4
      %s35 = int_to_ptr.vmem [resolvable:$true] %s34
      %37 = dma.hbm_to_vmem [thread:$0]  %s33, 128, %s35, [#allocation6]
    $region9: #{tpu_custom_call.1} parent=1 // pred_fallthru
      _
    // Predicated region
    $region10: #{tpu_custom_call.1} parent=1 // pred_check
      _
    $region11: #{tpu_custom_call.1} parent=1 // pred_check_branch
      %39 = sbr.rel (0) target = $region13
    $region12: #{tpu_custom_call.1} parent=1 // pred_region
      _
    $region13: #{tpu_custom_call.1} parent=1 // pred_fallthru
      _
    // Predicated region
    $region14: #{tpu_custom_call.1} parent=1 // pred_check
      _
    $region15: #{tpu_custom_call.1} parent=1 // pred_check_branch
      %41 = sbr.rel (0) target = $region17
    $region16: #{tpu_custom_call.1} parent=1 // pred_region
      %43 = vsyncadd [#allocation6], 0
      %s44 = sshll.u32 %s3, 4
      %s45 = int_to_ptr.hbm [resolvable:$true] %s44
      %s46 = sshll.u32 [#allocation7], 4
      %s47 = int_to_ptr.vmem [resolvable:$true] %s46
      %52 = dma.hbm_to_vmem [thread:$0]  %s45, 2048, %s47, [#allocation6], 128, 128, 8
    $region17: #{tpu_custom_call.1} parent=1 // pred_fallthru
      _
    // Predicated region
    $region18: #{tpu_custom_call.1} parent=1 // pred_check
      _
    $region19: #{tpu_custom_call.1} parent=1 // pred_check_branch
      %54 = sbr.rel (0) target = $region21
    $region20: #{tpu_custom_call.1} parent=1 // pred_region
      _
    $region21: #{tpu_custom_call.1} parent=1 // pred_fallthru
      _
    // Predicated region
    $region22: #{tpu_custom_call.1} parent=1 // pred_check
      _
    $region23: #{tpu_custom_call.1} parent=1 // pred_check_branch
      %56 = sbr.rel (0) target = $region25
    $region24: #{tpu_custom_call.1} parent=1 // pred_region
      %58 = vsyncadd [#allocation9], 0
      %s59 = sshll.u32 %s5, 4
      %s60 = int_to_ptr.hbm [resolvable:$true] %s59
      %s61 = sshll.u32 [#allocation8], 4
      %s62 = int_to_ptr.vmem [resolvable:$true] %s61
      %67 = dma.hbm_to_vmem [thread:$0]  %s60, 2048, %s62, [#allocation9], 128, 128, 8
    $region25: #{tpu_custom_call.1} parent=1 // pred_fallthru
      _
    // Predicated region
    $region26: #{tpu_custom_call.1} parent=1 // pred_check
      _
    $region27: #{tpu_custom_call.1} parent=1 // pred_check_branch
      %69 = sbr.rel (0) target = $region29
    $region28: #{tpu_custom_call.1} parent=1 // pred_region
      _
    $region29: #{tpu_custom_call.1} parent=1 // pred_fallthru
      _
    // Predicated region
    $region30: #{tpu_custom_call.1} parent=1 // pred_check
      _
    $region31: #{tpu_custom_call.1} parent=1 // pred_check_branch
      %71 = sbr.rel (0) target = $region33
    $region32: #{tpu_custom_call.1} parent=1 // pred_region
      %73 = dma.done [#allocation3], 128
    $region33: #{tpu_custom_call.1} parent=1 // pred_fallthru
      _
    // Predicated region
    $region34: #{tpu_custom_call.1} parent=1 // pred_check
      _
    $region35: #{tpu_custom_call.1} parent=1 // pred_check_branch
      %75 = sbr.rel (0) target = $region37
    $region36: #{tpu_custom_call.1} parent=1 // pred_region
      %77 = dma.done [#allocation6], 128
    $region37: #{tpu_custom_call.1} parent=1 // pred_fallthru
      _
    // Predicated region
    $region38: #{tpu_custom_call.1} parent=1 // pred_check
      _
    $region39: #{tpu_custom_call.1} parent=1 // pred_check_branch
      %79 = sbr.rel (0) target = $region41
    $region40: #{tpu_custom_call.1} parent=1 // pred_region
      %81 = dma.done [#allocation6], 2048
    $region41: #{tpu_custom_call.1} parent=1 // pred_fallthru
      _
    // Predicated region
    $region42: #{tpu_custom_call.1} parent=1 // pred_check
      _
    $region43: #{tpu_custom_call.1} parent=1 // pred_check_branch
      %83 = sbr.rel (0) target = $region45
    $region44: #{tpu_custom_call.1} parent=1 // pred_region
      %85 = dma.done [#allocation9], 2048
    $region45: #{tpu_custom_call.1} parent=1 // pred_fallthru
      _
    %v86 = vld [vmem:[#allocation2] sm:$0xff]
    %v87 = vld [vmem:[#allocation5] sm:$0xff]
    %v88 = vld [vmem:[%s2] sm:$0x1]
    %v90 = vperm.slane %v88, 0
    %vm92 = vcmask 64512
    %v94 = vsel %vm92, %v86, 0
    %96 = vmatpush.msra.mxu0 0.0
    %97 = vmatpush.msra.mxu0 0.0
    %98 = vmatpush.msra.mxu0 0.0
    %99 = vmatpush.msra.mxu0 0.0
    %100 = vmatpush.msra.mxu0 0.0
    %101 = vmatpush.msra.mxu0 0.0
    %102 = vmatpush.msra.mxu0 0.0
    %103 = vmatpush.msra.mxu0 0.0
    %104 = vmatpush.msra.mxu0 0.0
    %105 = vmatpush.msra.mxu0 0.0
    %106 = vmatpush.msra.mxu0 0.0
    %107 = vmatpush.msra.mxu0 0.0
    %108 = vmatpush.msra.mxu0 0.0
    %109 = vmatpush.msra.mxu0 0.0
    %110 = vmatpush.msra.mxu0 0.0
    %111 = vmatpush.msra.mxu0 %v87
    %112 = vmatmul.f32.gmra.mxu0 %v94
    %v113 = vpop.f32.mrf.mxu0
    %v114 = vadd.f32 %v90, %v113
    %115 = vdwg.mxu0
    %v116 = vtanh.pop %v114
    %v117 = vld [vmem:[#allocation7] sm:$0xff]
    %v118 = vld [vmem:[#allocation7 + $0x8] sm:$0xff]
    %v119 = vld [vmem:[#allocation7 + $0x10] sm:$0xff]
    %v120 = vld [vmem:[#allocation7 + $0x18] sm:$0xff]
    %v121 = vld [vmem:[#allocation7 + $0x20] sm:$0xff]
    %v122 = vld [vmem:[#allocation7 + $0x28] sm:$0xff]
    %v123 = vld [vmem:[#allocation7 + $0x30] sm:$0xff]
    %v124 = vld [vmem:[#allocation7 + $0x38] sm:$0xff]
    %v125 = vld [vmem:[#allocation7 + $0x40] sm:$0xff]
    %v126 = vld [vmem:[#allocation7 + $0x48] sm:$0xff]
    %v127 = vld [vmem:[#allocation7 + $0x50] sm:$0xff]
    %v128 = vld [vmem:[#allocation7 + $0x58] sm:$0xff]
    %v129 = vld [vmem:[#allocation7 + $0x60] sm:$0xff]
    %v130 = vld [vmem:[#allocation7 + $0x68] sm:$0xff]
    %v131 = vld [vmem:[#allocation7 + $0x70] sm:$0xff]
    %v132 = vld [vmem:[#allocation7 + $0x78] sm:$0xff]
    %v133 = vld [vmem:[%s4] sm:$0x1]
    %v135 = vperm.slane %v133, 0
    %137 = vmatpush.msra.mxu0 %v132
    %138 = vmatpush.msra.mxu0 %v131
    %139 = vmatpush.msra.mxu0 %v130
    %140 = vmatpush.msra.mxu0 %v129
    %141 = vmatpush.msra.mxu0 %v128
    %142 = vmatpush.msra.mxu0 %v127
    %143 = vmatpush.msra.mxu0 %v126
    %144 = vmatpush.msra.mxu0 %v125
    %145 = vmatpush.msra.mxu0 %v124
    %146 = vmatpush.msra.mxu0 %v123
    %147 = vmatpush.msra.mxu0 %v122
    %148 = vmatpush.msra.mxu0 %v121
    %149 = vmatpush.msra.mxu0 %v120
    %150 = vmatpush.msra.mxu0 %v119
    %151 = vmatpush.msra.mxu0 %v118
    %152 = vmatpush.msra.mxu0 %v117
    %153 = vmatmul.f32.gmra.mxu0 %v116
    %v154 = vpop.f32.mrf.mxu0
    %v155 = vadd.f32 %v135, %v154
    %156 = vdwg.mxu0
    %v157 = vtanh.pop %v155
    %v158 = vld [vmem:[#allocation8] sm:$0xff]
    %v159 = vld [vmem:[#allocation8 + $0x8] sm:$0xff]
    %v160 = vld [vmem:[#allocation8 + $0x10] sm:$0xff]
    %v161 = vld [vmem:[#allocation8 + $0x18] sm:$0xff]
    %v162 = vld [vmem:[#allocation8 + $0x20] sm:$0xff]
    %v163 = vld [vmem:[#allocation8 + $0x28] sm:$0xff]
    %v164 = vld [vmem:[#allocation8 + $0x30] sm:$0xff]
    %v165 = vld [vmem:[#allocation8 + $0x38] sm:$0xff]
    %v166 = vld [vmem:[#allocation8 + $0x40] sm:$0xff]
    %v167 = vld [vmem:[#allocation8 + $0x48] sm:$0xff]
    %v168 = vld [vmem:[#allocation8 + $0x50] sm:$0xff]
    %v169 = vld [vmem:[#allocation8 + $0x58] sm:$0xff]
    %v170 = vld [vmem:[#allocation8 + $0x60] sm:$0xff]
    %v171 = vld [vmem:[#allocation8 + $0x68] sm:$0xff]
    %v172 = vld [vmem:[#allocation8 + $0x70] sm:$0xff]
    %v173 = vld [vmem:[#allocation8 + $0x78] sm:$0xff]
    %v174 = vld [vmem:[%s6] sm:$0x1]
    %v176 = vperm.slane %v174, 0
    %178 = vmatpush.msra.mxu0 %v173
    %179 = vmatpush.msra.mxu0 %v172
    %180 = vmatpush.msra.mxu0 %v171
    %181 = vmatpush.msra.mxu0 %v170
    %182 = vmatpush.msra.mxu0 %v169
    %183 = vmatpush.msra.mxu0 %v168
    %184 = vmatpush.msra.mxu0 %v167
    %185 = vmatpush.msra.mxu0 %v166
    %186 = vmatpush.msra.mxu0 %v165
    %187 = vmatpush.msra.mxu0 %v164
    %188 = vmatpush.msra.mxu0 %v163
    %189 = vmatpush.msra.mxu0 %v162
    %190 = vmatpush.msra.mxu0 %v161
    %191 = vmatpush.msra.mxu0 %v160
    %192 = vmatpush.msra.mxu0 %v159
    %193 = vmatpush.msra.mxu0 %v158
    %194 = vmatmul.f32.gmra.mxu0 %v157
    %v195 = vpop.f32.mrf.mxu0
    %v196 = vadd.f32 %v176, %v195
    %197 = vdwg.mxu0
    %v198 = vlaneseq
    %v199 = vand.u32 %v198, 127
    %vm200 = vcmp.lt.s32.totalorder %v199, 2
    %v201 = vsel %vm200, %v196, -1e+30
    %202 = vmax.xlane.f32.xlu0 %v201
    %v203 = vpop.xlane.xlu0 %202
    %v204 = vsub.f32 %v201, %v203
    %v205 = vmul.f32 %v204, 1.442695
    %v206 = vpow.pop %v205
    %207 = vadd.xlane.f32.xlu0 %v206
    %v208 = vpop.xlane.xlu0 %207
    %v209 = vrcp.pop %v208
    %v210 = vmul.f32 %v208, %v209
    %v211 = vsub.f32 1.0, %v210
    %v212 = vmul.f32 %v209, %v211
    %v213 = vadd.f32 %v209, %v212
    %vm214 = vweird.f32 %v208
    %vm215 = vweird.f32 %v209
    %vm216 = vmor %vm214, %vm215
    %v217 = vsel %vm216, %v209, %v213
    %v218 = vand.u32 2147483647, %v208
    %vm219 = vcmp.eq.f32.partialorder %v218, 8.507059e+37
    %v220 = vand.u32 %v208, 2147483648
    %v221 = vor.u32 1.1754944e-38, %v220
    %v222 = vsel %vm219, %v221, %v217
    %v223 = vmul.f32 %v206, %v222
    %224 = vst [vmem:[#allocation10] sm:$0xff] %v223
    // Predicated region
    $region46: #{tpu_custom_call.1} parent=1 // pred_check
      _
    $region47: #{tpu_custom_call.1} parent=1 // pred_check_branch
      %226 = sbr.rel (0) target = $region49
    $region48: #{tpu_custom_call.1} parent=1 // pred_region
      %228 = vsyncadd [#allocation4], 0
      %s230 = sshll.u32 [#allocation10], 4
      %s231 = int_to_ptr.vmem [resolvable:$true] %s230
      %s232 = sshll.u32 %s7, 4
      %s233 = int_to_ptr.hbm [resolvable:$true] %s232
      %235 = dma.vmem_to_hbm [thread:$0]  %s231, 128, %s233, [#allocation4]
    $region49: #{tpu_custom_call.1} parent=1 // pred_fallthru
      _
    // Predicated region
    $region50: #{tpu_custom_call.1} parent=1 // pred_check
      _
    $region51: #{tpu_custom_call.1} parent=1 // pred_check_branch
      %237 = sbr.rel (0) target = $region53
    $region52: #{tpu_custom_call.1} parent=1 // pred_region
      %239 = dma.done [#allocation4], 128
    $region53: #{tpu_custom_call.1} parent=1 // pred_fallthru
      _
    %240 = vsyncpa [#allocation3], 1
    %241 = vsyncpa [#allocation6], 1
    %242 = vsyncpa [#allocation9], 1
    %243 = vsyncpa [#allocation4], 1

</llo_original>
